<compile_context>
chip_gen: v7x
topology: tpu7x:2x2x1
jax: 0.10.0
libtpu: 0.0.40
codegen_flags: <defaults>
</compile_context>

<pallas_src>
import jax
import jax.numpy as jnp
from jax.experimental import pallas as pl
from jax.experimental.pallas import tpu as pltpu

LANE = 128


def _round_up(x, m):
    return ((x + m - 1) // m) * m


def _pad2d(x, rows, cols):
    return jnp.pad(x, ((0, rows - x.shape[0]), (0, cols - x.shape[1])))


def _mtl_kernel(x_ref, w1_ref, wa_ref, wb_ref, out_ref):
    """One batch tile.  All operands are zero-padded to 128-lane multiples."""
    # hiden1: relu(x @ W1), x = wrapper-side concat(jd_sum, res_sum).
    h = jnp.maximum(
        jnp.dot(x_ref[...], w1_ref[...], preferred_element_type=jnp.float32),
        0.0)                                                    # [Bt, D2_pad] f32

    # Fused heads: one matmul for all three first-layer Linears (+ReLU),
    # one matmul against the block-diagonal second-layer weights.
    t = jnp.maximum(
        jnp.dot(h.astype(wa_ref.dtype), wa_ref[...],
                preferred_element_type=jnp.float32), 0.0)       # [Bt, H_pad]
    z = jnp.dot(t.astype(wb_ref.dtype), wb_ref[...],
                preferred_element_type=jnp.float32)             # [Bt, 128]

    # Sigmoid: exp goes to the EUP; pl.reciprocal keeps the divide off the VALU.
    # Padded lanes produce 0.5 and are sliced off in the wrapper; the store is a
    # full unmasked lane-dense vst.
    out_ref[...] = pl.reciprocal(1.0 + jnp.exp(-z)).astype(out_ref.dtype)


def pack_weights(params, emb_dim, compute_dtype=jnp.bfloat16):
    """One-time weight packing (pad + fuse heads + cast). Do NOT call per step."""
    dim = 2 * emb_dim
    assert dim % 6 == 0, "emb_dim must be divisible by 3 (so 2*emb_dim % 6 == 0)"
    d2, d3, d6 = dim // 2, dim // 3, dim // 6

    DIM_pad = _round_up(dim, LANE)
    D2_pad = _round_up(d2, LANE)
    H_pad = _round_up(3 * d6, LANE)
    O_pad = LANE  # lane-dense output block; real result lives in columns 0..2

    # hiden1 weight, zero-padded (stored as [in, out], i.e. x @ W).
    w1 = _pad2d(params["w1"], DIM_pad, D2_pad).astype(compute_dtype)

    # WA embeds w21a (rows 0:d3), w22a (rows d6:d2), w23a (rows 0:d2) at
    # disjoint column blocks; zero rows/cols contribute nothing.
    wa = jnp.zeros((D2_pad, H_pad), jnp.float32)
    wa = wa.at[:d3, 0:d6].set(params["w21a"])
    wa = wa.at[d6:d2, d6:2 * d6].set(params["w22a"])
    wa = wa.at[:d2, 2 * d6:3 * d6].set(params["w23a"])
    wa = wa.astype(compute_dtype)

    # WB is block-diagonal: head k's [d6, 1] second Linear lands in column k.
    wb = jnp.zeros((H_pad, O_pad), jnp.float32)
    wb = wb.at[0:d6, 0:1].set(params["w21b"])
    wb = wb.at[d6:2 * d6, 1:2].set(params["w22b"])
    wb = wb.at[2 * d6:3 * d6, 2:3].set(params["w23b"])
    wb = wb.astype(compute_dtype)

    return {"w1": w1, "wa": wa, "wb": wb,
            "emb_dim": emb_dim, "compute_dtype": compute_dtype}


def mtl_forward_pallas(jd_idx, resume_idx, position_idx, params, packed,
                       b_tile=None):
    """jd_idx/resume_idx/position_idx: int32 [B, L]; position unused (weight=False)."""
    del position_idx  # self.weight path is undefined in the original __init__
    emb_dim = packed["emb_dim"]
    compute_dtype = packed["compute_dtype"]
    dim = 2 * emb_dim
    B = jd_idx.shape[0]

    DIM_pad = packed["w1"].shape[0]
    D2_pad = packed["w1"].shape[1]
    H_pad = packed["wa"].shape[1]
    O_pad = packed["wb"].shape[1]

    itemsize = jnp.dtype(compute_dtype).itemsize
    sub = 16 if itemsize < 4 else 8  # sublane packing per vreg

    # --- batch tiling: large tiles amortize the ~0.35us/step pipeline overhead,
    #     but keep >=2 grid steps when the batch allows (v7x megacore). ---
    if b_tile is None:
        b_tile = 1024  # sweep 512-2048
    b_tile = _round_up(b_tile, sub)
    b_tile = min(b_tile, _round_up(B, sub))
    if B > sub:
        half = _round_up(-(-B // 2), sub)
        b_tile = min(b_tile, half)
    b_tile = max(sub, b_tile)
    B_pad = _round_up(B, b_tile)

    # --- gather + seq-sum + concat in JAX glue (only [B_pad, DIM_pad] crosses
    #     into the kernel); pad + cast folded into one expression so XLA fuses
    #     the whole chain into one write of the padded activation. ---
    jd_sum = jnp.sum(jnp.take(params["job_emb"], jd_idx, axis=0), axis=1)
    res_sum = jnp.sum(jnp.take(params["geek_emb"], resume_idx, axis=0), axis=1)
    x = _pad2d(jnp.concatenate([jd_sum, res_sum], axis=-1),
               B_pad, DIM_pad).astype(compute_dtype)

    grid = (B_pad // b_tile,)

    x_spec = pl.BlockSpec((b_tile, DIM_pad), lambda b: (b, 0))
    w1_spec = pl.BlockSpec((DIM_pad, D2_pad), lambda b: (0, 0))  # resident weights
    wa_spec = pl.BlockSpec((D2_pad, H_pad), lambda b: (0, 0))
    wb_spec = pl.BlockSpec((H_pad, O_pad), lambda b: (0, 0))
    out_spec = pl.BlockSpec((b_tile, O_pad), lambda b: (b, 0))

    # --- VMEM budget derived from the tile (x2 double buffers) + f32 scratch ---
    w_bytes = (DIM_pad * D2_pad + D2_pad * H_pad + H_pad * O_pad) * itemsize
    io_bytes = b_tile * (DIM_pad + O_pad) * itemsize
    interm_bytes = b_tile * (D2_pad + H_pad + O_pad) * 4
    vmem_est = 2 * (w_bytes + io_bytes) + interm_bytes
    vmem_limit = int(min(max(2 * vmem_est, 16 * 1024 * 1024), 64 * 1024 * 1024))

    flops = 2 * B_pad * (DIM_pad * D2_pad + D2_pad * H_pad + H_pad * O_pad)
    bytes_accessed = ((B_pad * DIM_pad + DIM_pad * D2_pad + D2_pad * H_pad
                       + H_pad * O_pad + B_pad * O_pad) * itemsize)

    out = pl.pallas_call(
        _mtl_kernel,
        out_shape=jax.ShapeDtypeStruct((B_pad, O_pad), compute_dtype),
        grid=grid,
        in_specs=[x_spec, w1_spec, wa_spec, wb_spec],
        out_specs=out_spec,
        compiler_params=pltpu.CompilerParams(
            dimension_semantics=("parallel",),
            vmem_limit_bytes=vmem_limit),
        cost_estimate=pl.CostEstimate(
            flops=flops,
            transcendentals=B_pad * O_pad,
            bytes_accessed=bytes_accessed),
    )(x, packed["w1"], packed["wa"], packed["wb"])

    # Only columns 0..2 are real; upcast the tiny slice for the caller.
    return out[:B, :3].astype(jnp.float32)


def mtl_forward_ref(jd_idx, resume_idx, position_idx, params, emb_dim):
    """Pure-JAX reference replicating the PyTorch forward semantics."""
    del position_idx
    dim = 2 * emb_dim
    jd_emb = jnp.sum(jnp.take(params["job_emb"], jd_idx, axis=0), axis=1)
    res_emb = jnp.sum(jnp.take(params["geek_emb"], resume_idx, axis=0), axis=1)
    x = jnp.concatenate([jd_emb, res_emb], axis=-1)
    x = jnp.maximum(x @ params["w1"], 0.0)
    sig = lambda z: 1.0 / (1.0 + jnp.exp(-z))
    x1 = sig(jnp.maximum(x[:, : dim // 3] @ params["w21a"], 0.0) @ params["w21b"])
    x2 = sig(jnp.maximum(x[:, dim // 6:] @ params["w22a"], 0.0) @ params["w22b"])
    x3 = sig(jnp.maximum(x @ params["w23a"], 0.0) @ params["w23b"])
    return jnp.concatenate([x1, x2, x3], axis=-1)


def init_params(key, n_job, n_geek, emb_dim):
    dim = 2 * emb_dim
    ks = jax.random.split(key, 9)
    u = lambda k, shape, s: (jax.random.uniform(k, shape, jnp.float32) * 2.0 - 1.0) * s
    return {
        "job_emb": u(ks[0], (n_job, emb_dim), 1.0),
        "geek_emb": u(ks[1], (n_geek, emb_dim), 1.0),
        # Linear weights stored as [in, out] (PyTorch stores [out, in]).
        "w1":   u(ks[2], (dim, dim // 2), 0.2),
        "w21a": u(ks[3], (dim // 3, dim // 6), 0.3),
        "w21b": u(ks[4], (dim // 6, 1), 0.3),
        "w22a": u(ks[5], (dim // 3, dim // 6), 0.3),
        "w22b": u(ks[6], (dim // 6, 1), 0.3),
        "w23a": u(ks[7], (dim // 2, dim // 6), 0.3),
        "w23b": u(ks[8], (dim // 6, 1), 0.3),
    }


if __name__ == "__main__":
    n_job, n_geek, emb_dim = 50, 60, 36   # emb_dim=36 keeps dim//2, //3, //6 exact
    key = jax.random.PRNGKey(0)
    k_p, k_jd, k_res, k_pos, k_jd2, k_res2 = jax.random.split(key, 6)
    params = init_params(k_p, n_job, n_geek, emb_dim)

    # --- small-batch f32 path: tight tolerance check ---
    B, L = 4, 8
    jd_idx = jax.random.randint(k_jd, (B, L), 0, n_job, dtype=jnp.int32)
    resume_idx = jax.random.randint(k_res, (B, L), 0, n_geek, dtype=jnp.int32)
    position_idx = jax.random.randint(k_pos, (B, L), 0, n_job, dtype=jnp.int32)

    packed_f32 = pack_weights(params, emb_dim, compute_dtype=jnp.float32)
    out = mtl_forward_pallas(jd_idx, resume_idx, position_idx, params, packed_f32)
    out = jax.block_until_ready(out)
    ref = mtl_forward_ref(jd_idx, resume_idx, position_idx, params, emb_dim)
    assert out.shape == (B, 3), out.shape
    assert jnp.allclose(out, ref, atol=1e-5, rtol=1e-5), (out, ref)

    # --- bf16 path (recommended default on v6e/v7x), multi-step grid ---
    B2 = 300
    jd2 = jax.random.randint(k_jd2, (B2, L), 0, n_job, dtype=jnp.int32)
    res2 = jax.random.randint(k_res2, (B2, L), 0, n_geek, dtype=jnp.int32)
    packed_bf16 = pack_weights(params, emb_dim, compute_dtype=jnp.bfloat16)
    out2 = mtl_forward_pallas(jd2, res2, None, params, packed_bf16)
    out2 = jax.block_until_ready(out2)
    ref2 = mtl_forward_ref(jd2, res2, None, params, emb_dim)
    assert out2.shape == (B2, 3), out2.shape
    assert jnp.allclose(out2, ref2, atol=5e-2, rtol=5e-2), \
        float(jnp.max(jnp.abs(out2 - ref2)))

    print("KERNEL_OK")
</pallas_src>

<mosaic_0001>
module attributes {stable_mosaic.version = 11 : i64} {
  func.func @_mtl_kernel(%arg0: i32, %arg1: memref<8x128xf32, #tpu.memory_space<vmem>>, %arg2: memref<128x128xf32, #tpu.memory_space<vmem>>, %arg3: memref<128x128xf32, #tpu.memory_space<vmem>>, %arg4: memref<128x128xf32, #tpu.memory_space<vmem>>, %arg5: memref<8x128xf32, #tpu.memory_space<vmem>>) attributes {dimension_semantics = [#tpu.dimension_semantics<parallel>], iteration_bounds = array<i64: 1>, scalar_prefetch = 0 : i64, scratch_operands = 0 : i64, tpu.core_type = #tpu.core_type<tc>, window_params = [{transform_indices = @transform_0, window_bounds = array<i64: 8, 128>}, {pipeline_mode = #tpu.pipeline_mode<synchronous>, transform_indices = @transform_1, window_bounds = array<i64: 128, 128>}, {pipeline_mode = #tpu.pipeline_mode<synchronous>, transform_indices = @transform_2, window_bounds = array<i64: 128, 128>}, {pipeline_mode = #tpu.pipeline_mode<synchronous>, transform_indices = @transform_3, window_bounds = array<i64: 128, 128>}, {transform_indices = @transform_4, window_bounds = array<i64: 8, 128>}]} {
    %c0 = arith.constant 0 : index
    %c0_0 = arith.constant 0 : index
    %0 = vector.load %arg1[%c0, %c0_0] : memref<8x128xf32, #tpu.memory_space<vmem>>, vector<8x128xf32>
    %c0_1 = arith.constant 0 : index
    %c0_2 = arith.constant 0 : index
    %1 = vector.load %arg2[%c0_1, %c0_2] : memref<128x128xf32, #tpu.memory_space<vmem>>, vector<128x128xf32>
    %cst = arith.constant dense<0.000000e+00> : vector<8x128xf32>
    %2 = tpu.matmul %0, %1, %cst {dimension_numbers = #tpu.dot_dimension_numbers<[1], [0], [0], [1], [0, 0, 1, 1], [], []>} : vector<8x128xf32>, vector<128x128xf32>, vector<8x128xf32> -> vector<8x128xf32>
    %cst_3 = arith.constant 0.000000e+00 : f32
    %3 = vector.broadcast %cst_3 : f32 to vector<8x128xf32>
    %4 = arith.maximumf %2, %3 : vector<8x128xf32>
    %c0_4 = arith.constant 0 : index
    %c0_5 = arith.constant 0 : index
    %5 = vector.load %arg3[%c0_4, %c0_5] : memref<128x128xf32, #tpu.memory_space<vmem>>, vector<128x128xf32>
    %cst_6 = arith.constant dense<0.000000e+00> : vector<8x128xf32>
    %6 = tpu.matmul %4, %5, %cst_6 {dimension_numbers = #tpu.dot_dimension_numbers<[1], [0], [0], [1], [0, 0, 1, 1], [], []>} : vector<8x128xf32>, vector<128x128xf32>, vector<8x128xf32> -> vector<8x128xf32>
    %cst_7 = arith.constant 0.000000e+00 : f32
    %7 = vector.broadcast %cst_7 : f32 to vector<8x128xf32>
    %8 = arith.maximumf %6, %7 : vector<8x128xf32>
    %c0_8 = arith.constant 0 : index
    %c0_9 = arith.constant 0 : index
    %9 = vector.load %arg4[%c0_8, %c0_9] : memref<128x128xf32, #tpu.memory_space<vmem>>, vector<128x128xf32>
    %cst_10 = arith.constant dense<0.000000e+00> : vector<8x128xf32>
    %10 = tpu.matmul %8, %9, %cst_10 {dimension_numbers = #tpu.dot_dimension_numbers<[1], [0], [0], [1], [0, 0, 1, 1], [], []>} : vector<8x128xf32>, vector<128x128xf32>, vector<8x128xf32> -> vector<8x128xf32>
    %cst_11 = arith.constant 0.000000e+00 : f32
    %11 = vector.broadcast %cst_11 : f32 to vector<8x128xf32>
    %12 = arith.subf %11, %10 : vector<8x128xf32>
    %13 = math.exp %12 : vector<8x128xf32>
    %cst_12 = arith.constant 1.000000e+00 : f32
    %14 = vector.broadcast %cst_12 : f32 to vector<8x128xf32>
    %15 = arith.addf %14, %13 : vector<8x128xf32>
    %16 = tpu.reciprocal %15 : vector<8x128xf32> -> vector<8x128xf32>
    %c0_13 = arith.constant 0 : index
    %c0_14 = arith.constant 0 : index
    %17 = vector.load %arg5[%c0_13, %c0_14] : memref<8x128xf32, #tpu.memory_space<vmem>>, vector<8x128xf32>
    tpu.vector_store %arg5[%c0_13, %c0_14], %16 {strides = array<i32>} : memref<8x128xf32, #tpu.memory_space<vmem>>, vector<8x128xf32>,
    return
  }
  func.func @transform_0(%arg0: i32) -> (i32, i32) {
    %c0_i32 = arith.constant 0 : i32
    %c0_i32_0 = arith.constant 0 : i32
    return %arg0, %c0_i32 : i32, i32
  }
  func.func @transform_1(%arg0: i32) -> (i32, i32) {
    %c0_i32 = arith.constant 0 : i32
    %c0_i32_0 = arith.constant 0 : i32
    %c0_i32_1 = arith.constant 0 : i32
    return %c0_i32, %c0_i32_0 : i32, i32
  }
  func.func @transform_2(%arg0: i32) -> (i32, i32) {
    %c0_i32 = arith.constant 0 : i32
    %c0_i32_0 = arith.constant 0 : i32
    %c0_i32_1 = arith.constant 0 : i32
    return %c0_i32, %c0_i32_0 : i32, i32
  }
  func.func @transform_3(%arg0: i32) -> (i32, i32) {
    %c0_i32 = arith.constant 0 : i32
    %c0_i32_0 = arith.constant 0 : i32
    %c0_i32_1 = arith.constant 0 : i32
    return %c0_i32, %c0_i32_0 : i32, i32
  }
  func.func @transform_4(%arg0: i32) -> (i32, i32) {
    %c0_i32 = arith.constant 0 : i32
    %c0_i32_0 = arith.constant 0 : i32
    return %arg0, %c0_i32 : i32, i32
  }
}

</mosaic_0001>

<llo_original>
// kernel: tpu_custom_call.1
$region0: #{tpu_custom_call.1}
  #allocation0 [shape = 'u32[]', space=smem, size = 0x4, offset = 0x4, fixed_abs, tag = 'smem constant byte address 0x4 - core index']
  #allocation1 [shape = 'u32[144,128]{1,0:T(1,128)}', space=vmem, size = 0x12000, scoped, tag = 'internal scratch']
  %s0 = inlined_call_operand.hbm [shape: f32[8,128], index: 0, kind: input, shape index: {}]
  %s1 = inlined_call_operand.hbm [shape: f32[128,128], index: 1, kind: input, shape index: {}]
  %s2 = inlined_call_operand.hbm [shape: f32[128,128], index: 2, kind: input, shape index: {}]
  %s3 = inlined_call_operand.hbm [shape: f32[128,128], index: 3, kind: input, shape index: {}]
  %s4 = inlined_call_operand.hbm [shape: f32[8,128], index: 4, kind: output, shape index: {}]
  %s5 = sld [smem:[#allocation0]]
  $region42: #{tpu_custom_call.1} parent=0
    _
  %s7 = ssub.s32 1, %s5
  %s8 = scalar_select 0, %s7, %s5
  $region1: #{tpu_custom_call.1} parent=0
    #allocation2 [shape = 'u8[4096]{0}', space=vmem, size = 0x1000, scoped, tag = 'input window, operand 0, single buffered']
    #allocation3 [shape = 's32[1]{0}', space=sflag, size = 0x4, scoped, tag = 'scoped memory for tpu_custom_call.1']
    #allocation4 [shape = 's32[1]{0}', space=sflag, size = 0x4, scoped, tag = 'scoped memory for tpu_custom_call.1']
    #allocation5 [shape = 'u8[65536]{0}', space=vmem, size = 0x10000, scoped, tag = 'input window, operand 1, single buffered']
    #allocation6 [shape = 's32[1]{0}', space=sflag, size = 0x4, scoped, tag = 'scoped memory for tpu_custom_call.1']
    #allocation7 [shape = 'u8[65536]{0}', space=vmem, size = 0x10000, scoped, tag = 'input window, operand 2, single buffered']
    #allocation8 [shape = 'u8[65536]{0}', space=vmem, size = 0x10000, scoped, tag = 'input window, operand 3, single buffered']
    #allocation9 [shape = 's32[1]{0}', space=sflag, size = 0x4, scoped, tag = 'scoped memory for tpu_custom_call.1']
    #allocation10 [shape = 'u8[4096]{0}', space=vmem, size = 0x1000, scoped, tag = 'output window, operand 0, single buffered']
    %9 = vsyncpa [#allocation3], 0
    %10 = vsyncpa [#allocation6], 0
    %11 = vsyncpa [#allocation9], 0
    %12 = vsyncpa [#allocation4], 0
    // Predicated region
    $region2: #{tpu_custom_call.1} parent=1 // pred_check
      _
    $region3: #{tpu_custom_call.1} parent=1 // pred_check_branch
      %14 = sbr.rel (0) target = $region5
    $region4: #{tpu_custom_call.1} parent=1 // pred_region
      %s16 = ssub.s32 128, 128
      %17 = vsyncadd [#allocation3], %s16
      %s19 = sshll.u32 [#allocation2], 4
      %s20 = int_to_ptr.vmem [resolvable:$true] %s19
      %22 = dma.hbm_to_vmem [thread:$0]  %s0, 128, %s20, [#allocation3]
    $region5: #{tpu_custom_call.1} parent=1 // pred_fallthru
      _
    // Predicated region
    $region6: #{tpu_custom_call.1} parent=1 // pred_check
      _
    $region7: #{tpu_custom_call.1} parent=1 // pred_check_branch
      %24 = sbr.rel (0) target = $region9
    $region8: #{tpu_custom_call.1} parent=1 // pred_region
      %s26 = ssub.s32 2048, 2048
      %27 = vsyncadd [#allocation6], %s26
      %s28 = sshll.u32 [#allocation5], 4
      %s29 = int_to_ptr.vmem [resolvable:$true] %s28
      %34 = dma.hbm_to_vmem [thread:$0]  %s1, 2048, %s29, [#allocation6], 128, 128, 8
    $region9: #{tpu_custom_call.1} parent=1 // pred_fallthru
      _
    // Predicated region
    $region10: #{tpu_custom_call.1} parent=1 // pred_check
      _
    $region11: #{tpu_custom_call.1} parent=1 // pred_check_branch
      %36 = sbr.rel (0) target = $region13
    $region12: #{tpu_custom_call.1} parent=1 // pred_region
      %s38 = ssub.s32 2048, 2048
      %39 = vsyncadd [#allocation6], %s38
      %s40 = sshll.u32 [#allocation7], 4
      %s41 = int_to_ptr.vmem [resolvable:$true] %s40
      %46 = dma.hbm_to_vmem [thread:$0]  %s2, 2048, %s41, [#allocation6], 128, 128, 8
    $region13: #{tpu_custom_call.1} parent=1 // pred_fallthru
      _
    // Predicated region
    $region14: #{tpu_custom_call.1} parent=1 // pred_check
      _
    $region15: #{tpu_custom_call.1} parent=1 // pred_check_branch
      %48 = sbr.rel (0) target = $region17
    $region16: #{tpu_custom_call.1} parent=1 // pred_region
      %s50 = ssub.s32 2048, 2048
      %51 = vsyncadd [#allocation9], %s50
      %s52 = sshll.u32 [#allocation8], 4
      %s53 = int_to_ptr.vmem [resolvable:$true] %s52
      %58 = dma.hbm_to_vmem [thread:$0]  %s3, 2048, %s53, [#allocation9], 128, 128, 8
    $region17: #{tpu_custom_call.1} parent=1 // pred_fallthru
      _
    // Predicated region
    $region18: #{tpu_custom_call.1} parent=1 // pred_check
      _
    $region19: #{tpu_custom_call.1} parent=1 // pred_check_branch
      %60 = sbr.rel (0) target = $region21
    $region20: #{tpu_custom_call.1} parent=1 // pred_region
      %61 = dma.done [#allocation3], 128
    $region21: #{tpu_custom_call.1} parent=1 // pred_fallthru
      _
    // Predicated region
    $region22: #{tpu_custom_call.1} parent=1 // pred_check
      _
    $region23: #{tpu_custom_call.1} parent=1 // pred_check_branch
      %63 = sbr.rel (0) target = $region25
    $region24: #{tpu_custom_call.1} parent=1 // pred_region
      %64 = dma.done [#allocation6], 2048
    $region25: #{tpu_custom_call.1} parent=1 // pred_fallthru
      _
    // Predicated region
    $region26: #{tpu_custom_call.1} parent=1 // pred_check
      _
    $region27: #{tpu_custom_call.1} parent=1 // pred_check_branch
      %66 = sbr.rel (0) target = $region29
    $region28: #{tpu_custom_call.1} parent=1 // pred_region
      %67 = dma.done [#allocation6], 2048
    $region29: #{tpu_custom_call.1} parent=1 // pred_fallthru
      _
    // Predicated region
    $region30: #{tpu_custom_call.1} parent=1 // pred_check
      _
    $region31: #{tpu_custom_call.1} parent=1 // pred_check_branch
      %69 = sbr.rel (0) target = $region33
    $region32: #{tpu_custom_call.1} parent=1 // pred_region
      %70 = dma.done [#allocation9], 2048
    $region33: #{tpu_custom_call.1} parent=1 // pred_fallthru
      _
    %v71 = vld [vmem:[#allocation2] sm:$0xff]
    %v72 = vld [vmem:[#allocation5] sm:$0xff]
    %v73 = vld [vmem:[#allocation5 + $0x8] sm:$0xff]
    %v74 = vld [vmem:[#allocation5 + $0x10] sm:$0xff]
    %v75 = vld [vmem:[#allocation5 + $0x18] sm:$0xff]
    %v76 = vld [vmem:[#allocation5 + $0x20] sm:$0xff]
    %v77 = vld [vmem:[#allocation5 + $0x28] sm:$0xff]
    %v78 = vld [vmem:[#allocation5 + $0x30] sm:$0xff]
    %v79 = vld [vmem:[#allocation5 + $0x38] sm:$0xff]
    %v80 = vld [vmem:[#allocation5 + $0x40] sm:$0xff]
    %v81 = vld [vmem:[#allocation5 + $0x48] sm:$0xff]
    %v82 = vld [vmem:[#allocation5 + $0x50] sm:$0xff]
    %v83 = vld [vmem:[#allocation5 + $0x58] sm:$0xff]
    %v84 = vld [vmem:[#allocation5 + $0x60] sm:$0xff]
    %v85 = vld [vmem:[#allocation5 + $0x68] sm:$0xff]
    %v86 = vld [vmem:[#allocation5 + $0x70] sm:$0xff]
    %v87 = vld [vmem:[#allocation5 + $0x78] sm:$0xff]
    %88 = vmatprep.subr.mxu0 0.0
    %89 = vmatpush1.msra.mxu0 %v72
    %90 = vmatprep.subr.mxu0 0.0
    %91 = vmatpush1.msra.mxu0 %v73
    %92 = vmatprep.subr.mxu0 0.0
    %93 = vmatpush1.msra.mxu0 %v74
    %94 = vmatprep.subr.mxu0 0.0
    %95 = vmatpush1.msra.mxu0 %v75
    %96 = vmatprep.subr.mxu0 0.0
    %97 = vmatpush1.msra.mxu0 %v76
    %98 = vmatprep.subr.mxu0 0.0
    %99 = vmatpush1.msra.mxu0 %v77
    %100 = vmatprep.subr.mxu0 0.0
    %101 = vmatpush1.msra.mxu0 %v78
    %102 = vmatprep.subr.mxu0 0.0
    %103 = vmatpush1.msra.mxu0 %v79
    %104 = vmatprep.subr.mxu0 0.0
    %105 = vmatpush1.msra.mxu0 %v80
    %106 = vmatprep.subr.mxu0 0.0
    %107 = vmatpush1.msra.mxu0 %v81
    %108 = vmatprep.subr.mxu0 0.0
    %109 = vmatpush1.msra.mxu0 %v82
    %110 = vmatprep.subr.mxu0 0.0
    %111 = vmatpush1.msra.mxu0 %v83
    %112 = vmatprep.subr.mxu0 0.0
    %113 = vmatpush1.msra.mxu0 %v84
    %114 = vmatprep.subr.mxu0 0.0
    %115 = vmatpush1.msra.mxu0 %v85
    %116 = vmatprep.subr.mxu0 0.0
    %117 = vmatpush1.msra.mxu0 %v86
    %118 = vmatprep.subr.mxu0 0.0
    %119 = vmatpush1.msra.mxu0 %v87
    %120 = vmatprep.subr.mxu0 0.0
    %121 = vmatpush1.msra.mxu0 0.0
    %122 = vmatprep.subr.mxu0 0.0
    %123 = vmatpush1.msra.mxu0 0.0
    %124 = vmatprep.subr.mxu0 0.0
    %125 = vmatpush1.msra.mxu0 0.0
    %126 = vmatprep.subr.mxu0 0.0
    %127 = vmatpush1.msra.mxu0 0.0
    %128 = vmatprep.subr.mxu0 0.0
    %129 = vmatpush1.msra.mxu0 0.0
    %130 = vmatprep.subr.mxu0 0.0
    %131 = vmatpush1.msra.mxu0 0.0
    %132 = vmatprep.subr.mxu0 0.0
    %133 = vmatpush1.msra.mxu0 0.0
    %134 = vmatprep.subr.mxu0 0.0
    %135 = vmatpush1.msra.mxu0 0.0
    %136 = vmatprep.subr.mxu0 0.0
    %137 = vmatpush1.msra.mxu0 0.0
    %138 = vmatprep.subr.mxu0 0.0
    %139 = vmatpush1.msra.mxu0 0.0
    %140 = vmatprep.subr.mxu0 0.0
    %141 = vmatpush1.msra.mxu0 0.0
    %142 = vmatprep.subr.mxu0 0.0
    %143 = vmatpush1.msra.mxu0 0.0
    %144 = vmatprep.subr.mxu0 0.0
    %145 = vmatpush1.msra.mxu0 0.0
    %146 = vmatprep.subr.mxu0 0.0
    %147 = vmatpush1.msra.mxu0 0.0
    %148 = vmatprep.subr.mxu0 0.0
    %149 = vmatpush1.msra.mxu0 0.0
    %150 = vmatprep.subr.mxu0 0.0
    %151 = vmatpush1.msra.mxu0 0.0
    %152 = vmatprep.mubr.f32.mxu0 0.0
    %153 = vmatmul.mubr.f32.gmra.mrb[0].mxu0 %v71
    %v154 = vpop.f32.mrb[0].mxu0
    %v155 = vadd.f32 0.0, %v154
    %v156 = vpop.f32.mrb[0].mxu0
    %157 = vdwg.mxu0
    %v158 = vmax.f32 %v155, 0.0
    %v159 = vld [vmem:[#allocation7] sm:$0xff]
    %v160 = vld [vmem:[#allocation7 + $0x8] sm:$0xff]
    %v161 = vld [vmem:[#allocation7 + $0x10] sm:$0xff]
    %v162 = vld [vmem:[#allocation7 + $0x18] sm:$0xff]
    %v163 = vld [vmem:[#allocation7 + $0x20] sm:$0xff]
    %v164 = vld [vmem:[#allocation7 + $0x28] sm:$0xff]
    %v165 = vld [vmem:[#allocation7 + $0x30] sm:$0xff]
    %v166 = vld [vmem:[#allocation7 + $0x38] sm:$0xff]
    %v167 = vld [vmem:[#allocation7 + $0x40] sm:$0xff]
    %v168 = vld [vmem:[#allocation7 + $0x48] sm:$0xff]
    %v169 = vld [vmem:[#allocation7 + $0x50] sm:$0xff]
    %v170 = vld [vmem:[#allocation7 + $0x58] sm:$0xff]
    %v171 = vld [vmem:[#allocation7 + $0x60] sm:$0xff]
    %v172 = vld [vmem:[#allocation7 + $0x68] sm:$0xff]
    %v173 = vld [vmem:[#allocation7 + $0x70] sm:$0xff]
    %v174 = vld [vmem:[#allocation7 + $0x78] sm:$0xff]
    %175 = vmatprep.subr.mxu0 0.0
    %176 = vmatpush1.msra.mxu0 %v159
    %177 = vmatprep.subr.mxu0 0.0
    %178 = vmatpush1.msra.mxu0 %v160
    %179 = vmatprep.subr.mxu0 0.0
    %180 = vmatpush1.msra.mxu0 %v161
    %181 = vmatprep.subr.mxu0 0.0
    %182 = vmatpush1.msra.mxu0 %v162
    %183 = vmatprep.subr.mxu0 0.0
    %184 = vmatpush1.msra.mxu0 %v163
    %185 = vmatprep.subr.mxu0 0.0
    %186 = vmatpush1.msra.mxu0 %v164
    %187 = vmatprep.subr.mxu0 0.0
    %188 = vmatpush1.msra.mxu0 %v165
    %189 = vmatprep.subr.mxu0 0.0
    %190 = vmatpush1.msra.mxu0 %v166
    %191 = vmatprep.subr.mxu0 0.0
    %192 = vmatpush1.msra.mxu0 %v167
    %193 = vmatprep.subr.mxu0 0.0
    %194 = vmatpush1.msra.mxu0 %v168
    %195 = vmatprep.subr.mxu0 0.0
    %196 = vmatpush1.msra.mxu0 %v169
    %197 = vmatprep.subr.mxu0 0.0
    %198 = vmatpush1.msra.mxu0 %v170
    %199 = vmatprep.subr.mxu0 0.0
    %200 = vmatpush1.msra.mxu0 %v171
    %201 = vmatprep.subr.mxu0 0.0
    %202 = vmatpush1.msra.mxu0 %v172
    %203 = vmatprep.subr.mxu0 0.0
    %204 = vmatpush1.msra.mxu0 %v173
    %205 = vmatprep.subr.mxu0 0.0
    %206 = vmatpush1.msra.mxu0 %v174
    %207 = vmatprep.subr.mxu0 0.0
    %208 = vmatpush1.msra.mxu0 0.0
    %209 = vmatprep.subr.mxu0 0.0
    %210 = vmatpush1.msra.mxu0 0.0
    %211 = vmatprep.subr.mxu0 0.0
    %212 = vmatpush1.msra.mxu0 0.0
    %213 = vmatprep.subr.mxu0 0.0
    %214 = vmatpush1.msra.mxu0 0.0
    %215 = vmatprep.subr.mxu0 0.0
    %216 = vmatpush1.msra.mxu0 0.0
    %217 = vmatprep.subr.mxu0 0.0
    %218 = vmatpush1.msra.mxu0 0.0
    %219 = vmatprep.subr.mxu0 0.0
    %220 = vmatpush1.msra.mxu0 0.0
    %221 = vmatprep.subr.mxu0 0.0
    %222 = vmatpush1.msra.mxu0 0.0
    %223 = vmatprep.subr.mxu0 0.0
    %224 = vmatpush1.msra.mxu0 0.0
    %225 = vmatprep.subr.mxu0 0.0
    %226 = vmatpush1.msra.mxu0 0.0
    %227 = vmatprep.subr.mxu0 0.0
    %228 = vmatpush1.msra.mxu0 0.0
    %229 = vmatprep.subr.mxu0 0.0
    %230 = vmatpush1.msra.mxu0 0.0
    %231 = vmatprep.subr.mxu0 0.0
    %232 = vmatpush1.msra.mxu0 0.0
    %233 = vmatprep.subr.mxu0 0.0
    %234 = vmatpush1.msra.mxu0 0.0
    %235 = vmatprep.subr.mxu0 0.0
    %236 = vmatpush1.msra.mxu0 0.0
    %237 = vmatprep.subr.mxu0 0.0
    %238 = vmatpush1.msra.mxu0 0.0
    %239 = vmatprep.mubr.f32.mxu0 0.0
    %240 = vmatmul.mubr.f32.gmra.mrb[0].mxu0 %v158
    %v241 = vpop.f32.mrb[0].mxu0
    %v242 = vadd.f32 0.0, %v241
    %v243 = vpop.f32.mrb[0].mxu0
    %244 = vdwg.mxu0
    %v245 = vmax.f32 %v242, 0.0
    %v246 = vld [vmem:[#allocation8] sm:$0xff]
    %v247 = vld [vmem:[#allocation8 + $0x8] sm:$0xff]
    %v248 = vld [vmem:[#allocation8 + $0x10] sm:$0xff]
    %v249 = vld [vmem:[#allocation8 + $0x18] sm:$0xff]
    %v250 = vld [vmem:[#allocation8 + $0x20] sm:$0xff]
    %v251 = vld [vmem:[#allocation8 + $0x28] sm:$0xff]
    %v252 = vld [vmem:[#allocation8 + $0x30] sm:$0xff]
    %v253 = vld [vmem:[#allocation8 + $0x38] sm:$0xff]
    %v254 = vld [vmem:[#allocation8 + $0x40] sm:$0xff]
    %v255 = vld [vmem:[#allocation8 + $0x48] sm:$0xff]
    %v256 = vld [vmem:[#allocation8 + $0x50] sm:$0xff]
    %v257 = vld [vmem:[#allocation8 + $0x58] sm:$0xff]
    %v258 = vld [vmem:[#allocation8 + $0x60] sm:$0xff]
    %v259 = vld [vmem:[#allocation8 + $0x68] sm:$0xff]
    %v260 = vld [vmem:[#allocation8 + $0x70] sm:$0xff]
    %v261 = vld [vmem:[#allocation8 + $0x78] sm:$0xff]
    %262 = vmatprep.subr.mxu0 0.0
    %263 = vmatpush1.msra.mxu0 %v246
    %264 = vmatprep.subr.mxu0 0.0
    %265 = vmatpush1.msra.mxu0 %v247
    %266 = vmatprep.subr.mxu0 0.0
    %267 = vmatpush1.msra.mxu0 %v248
    %268 = vmatprep.subr.mxu0 0.0
    %269 = vmatpush1.msra.mxu0 %v249
    %270 = vmatprep.subr.mxu0 0.0
    %271 = vmatpush1.msra.mxu0 %v250
    %272 = vmatprep.subr.mxu0 0.0
    %273 = vmatpush1.msra.mxu0 %v251
    %274 = vmatprep.subr.mxu0 0.0
    %275 = vmatpush1.msra.mxu0 %v252
    %276 = vmatprep.subr.mxu0 0.0
    %277 = vmatpush1.msra.mxu0 %v253
    %278 = vmatprep.subr.mxu0 0.0
    %279 = vmatpush1.msra.mxu0 %v254
    %280 = vmatprep.subr.mxu0 0.0
    %281 = vmatpush1.msra.mxu0 %v255
    %282 = vmatprep.subr.mxu0 0.0
    %283 = vmatpush1.msra.mxu0 %v256
    %284 = vmatprep.subr.mxu0 0.0
    %285 = vmatpush1.msra.mxu0 %v257
    %286 = vmatprep.subr.mxu0 0.0
    %287 = vmatpush1.msra.mxu0 %v258
    %288 = vmatprep.subr.mxu0 0.0
    %289 = vmatpush1.msra.mxu0 %v259
    %290 = vmatprep.subr.mxu0 0.0
    %291 = vmatpush1.msra.mxu0 %v260
    %292 = vmatprep.subr.mxu0 0.0
    %293 = vmatpush1.msra.mxu0 %v261
    %294 = vmatprep.subr.mxu0 0.0
    %295 = vmatpush1.msra.mxu0 0.0
    %296 = vmatprep.subr.mxu0 0.0
    %297 = vmatpush1.msra.mxu0 0.0
    %298 = vmatprep.subr.mxu0 0.0
    %299 = vmatpush1.msra.mxu0 0.0
    %300 = vmatprep.subr.mxu0 0.0
    %301 = vmatpush1.msra.mxu0 0.0
    %302 = vmatprep.subr.mxu0 0.0
    %303 = vmatpush1.msra.mxu0 0.0
    %304 = vmatprep.subr.mxu0 0.0
    %305 = vmatpush1.msra.mxu0 0.0
    %306 = vmatprep.subr.mxu0 0.0
    %307 = vmatpush1.msra.mxu0 0.0
    %308 = vmatprep.subr.mxu0 0.0
    %309 = vmatpush1.msra.mxu0 0.0
    %310 = vmatprep.subr.mxu0 0.0
    %311 = vmatpush1.msra.mxu0 0.0
    %312 = vmatprep.subr.mxu0 0.0
    %313 = vmatpush1.msra.mxu0 0.0
    %314 = vmatprep.subr.mxu0 0.0
    %315 = vmatpush1.msra.mxu0 0.0
    %316 = vmatprep.subr.mxu0 0.0
    %317 = vmatpush1.msra.mxu0 0.0
    %318 = vmatprep.subr.mxu0 0.0
    %319 = vmatpush1.msra.mxu0 0.0
    %320 = vmatprep.subr.mxu0 0.0
    %321 = vmatpush1.msra.mxu0 0.0
    %322 = vmatprep.subr.mxu0 0.0
    %323 = vmatpush1.msra.mxu0 0.0
    %324 = vmatprep.subr.mxu0 0.0
    %325 = vmatpush1.msra.mxu0 0.0
    %326 = vmatprep.mubr.f32.mxu0 0.0
    %327 = vmatmul.mubr.f32.gmra.mrb[0].mxu0 %v245
    %v328 = vpop.f32.mrb[0].mxu0
    %v329 = vadd.f32 0.0, %v328
    %v330 = vpop.f32.mrb[0].mxu0
    %331 = vdwg.mxu0
    %v332 = vsub.f32 0.0, %v329
    %v333 = vmul.f32 %v332, 1.442695
    %v334 = vpow.pop %v333
    %v335 = vadd.f32 %v334, 1.0
    %v336 = vrcp.pop %v335
    %337 = vst [vmem:[#allocation10] sm:$0xff] %v336
    // Predicated region
    $region34: #{tpu_custom_call.1} parent=1 // pred_check
      _
    $region35: #{tpu_custom_call.1} parent=1 // pred_check_branch
      %339 = sbr.rel (0) target = $region37
    $region36: #{tpu_custom_call.1} parent=1 // pred_region
      %s341 = ssub.s32 128, 128
      %342 = vsyncadd [#allocation4], %s341
      %s344 = sshll.u32 [#allocation10], 4
      %s345 = int_to_ptr.vmem [resolvable:$true] %s344
      %347 = dma.vmem_to_hbm [thread:$0]  %s345, 128, %s4, [#allocation4]
    $region37: #{tpu_custom_call.1} parent=1 // pred_fallthru
      _
    // Predicated region
    $region38: #{tpu_custom_call.1} parent=1 // pred_check
      _
    $region39: #{tpu_custom_call.1} parent=1 // pred_check_branch
      %349 = sbr.rel (0) target = $region41
    $region40: #{tpu_custom_call.1} parent=1 // pred_region
      %350 = dma.done [#allocation4], 128
    $region41: #{tpu_custom_call.1} parent=1 // pred_fallthru
      _
    %351 = vsyncpa [#allocation3], 1
    %352 = vsyncpa [#allocation6], 1
    %353 = vsyncpa [#allocation9], 1
    %354 = vsyncpa [#allocation4], 1

</llo_original>
